<compile_context>
chip_gen: v5e
topology: v5e:2x2
jax: 0.10.0
libtpu: 0.0.40
codegen_flags: <defaults>
</compile_context>

<pallas_src>
import jax
import jax.numpy as jnp
from jax.experimental import pallas as pl
from jax.experimental.pallas import tpu as pltpu

_LANE = 128   # lane width (last dim of a vreg)
_SUB = 8      # sublane count (second-to-last dim of a vreg)


def _round_up(a, m):
    return (a + m - 1) // m * m


def _kernel(x_ref, w1_ref, wl_ref, w2_ref, y_ref):
    """One batch tile: x_ref [tm, Kx], weights resident, y_ref [tm, Ny]."""
    x_blk = x_ref[...]                                              # [tm, Kx]
    # Stage 1: fused (W1, b1) matmul + tanh (EUP).  Padded columns of the
    # stage-1 weight are zero -> padded h columns are tanh(0) = 0, and the
    # corresponding W2 rows are zero, so padding never leaks into y.
    h = jnp.tanh(jnp.dot(x_blk, w1_ref[...],
                         preferred_element_type=jnp.float32))       # [tm, Hp]
    # Stage 2: linear branch (W_lin + b2 folded) plus nonlinear branch (W2).
    y = jnp.dot(x_blk, wl_ref[...], preferred_element_type=jnp.float32)
    y = y + jnp.dot(h, w2_ref[...], preferred_element_type=jnp.float32)
    y_ref[...] = y.astype(y_ref.dtype)                              # [tm, Ny]


def neural_lin_output(x, w_lin, w1, b1, w2, b2, *, tm=512):
    """Fused NeuralLinOutput forward.

    x:     [B, n_x]  (f32)
    w_lin: [n_x, n_y]   (pre-transposed, i.e. Linear weight^T)
    w1:    [n_x, H], b1: [1, H]
    w2:    [H, n_y], b2: [1, n_y]
    Returns [B, n_y] f32.
    """
    x = jnp.asarray(x, jnp.float32)
    B, n_x = x.shape
    H = w1.shape[1]
    n_y = w_lin.shape[1]

    # ---- padded sizes ------------------------------------------------------
    Kx = _round_up(n_x + 1, _LANE)   # x features + ones column (bias fold)
    Hp = _round_up(H, _LANE)         # hidden width, lane-aligned
    Ny = _round_up(n_y, _LANE)       # lane-dense output width

    # ---- fused, padded weights (built once in the wrapper; cheap) ----------
    # Stage 1: [Kx, Hp]; rows 0..n_x-1 = W1, row n_x = b1, rest zero.
    w_s1 = jnp.zeros((Kx, Hp), jnp.float32)
    w_s1 = w_s1.at[:n_x, :H].set(jnp.asarray(w1, jnp.float32))
    w_s1 = w_s1.at[n_x, :H].set(jnp.asarray(b1, jnp.float32).reshape(-1))

    # Linear branch: [Kx, Ny]; rows 0..n_x-1 = W_lin, row n_x = b2, rest zero.
    w_la = jnp.zeros((Kx, Ny), jnp.float32)
    w_la = w_la.at[:n_x, :n_y].set(jnp.asarray(w_lin, jnp.float32))
    w_la = w_la.at[n_x, :n_y].set(jnp.asarray(b2, jnp.float32).reshape(-1))

    # Nonlinear branch: [Hp, Ny]; rows 0..H-1 = W2, rest zero.
    w_s2 = jnp.zeros((Hp, Ny), jnp.float32)
    w_s2 = w_s2.at[:H, :n_y].set(jnp.asarray(w2, jnp.float32))

    # ---- augment + pad x ----------------------------------------------------
    # Row tile: multiple of 8 sublanes, clamped so tiny batches use one tile.
    tm = max(_SUB, min(_round_up(tm, _SUB), _round_up(B, _SUB)))
    Bp = _round_up(B, tm)
    x_aug = jnp.zeros((Bp, Kx), jnp.float32)
    x_aug = x_aug.at[:B, :n_x].set(x)
    x_aug = x_aug.at[:B, n_x].set(1.0)          # ones column -> bias rows

    y_pad = pl.pallas_call(
        _kernel,
        out_shape=jax.ShapeDtypeStruct((Bp, Ny), jnp.float32),
        grid=(Bp // tm,),
        in_specs=[
            pl.BlockSpec((tm, Kx), lambda i: (i, 0)),   # x: tiled over batch
            pl.BlockSpec((Kx, Hp), lambda i: (0, 0)),   # stage-1 weight: resident
            pl.BlockSpec((Kx, Ny), lambda i: (0, 0)),   # linear-branch weight: resident
            pl.BlockSpec((Hp, Ny), lambda i: (0, 0)),   # W2 weight: resident
        ],
        out_specs=pl.BlockSpec((tm, Ny), lambda i: (i, 0)),
        compiler_params=pltpu.CompilerParams(
            dimension_semantics=("parallel",),          # megacore on v7x
        ),
    )(x_aug, w_s1, w_la, w_s2)

    return y_pad[:B, :n_y]


def init_params(key, n_x, n_y, hidden_size):
    """Deterministic PyTorch-style uniform(-1/sqrt(fan_in), 1/sqrt(fan_in)) init.

    Weights are stored already transposed to [in, out] for the kernel.
    """
    k = jax.random.split(key, 5)

    def unif(k_, shape, fan_in):
        bound = 1.0 / jnp.sqrt(fan_in)
        return jax.random.uniform(k_, shape, jnp.float32, -bound, bound)

    w_lin = unif(k[0], (n_x, n_y), n_x)               # lin: Linear(n_x, n_y, bias=False)
    w1 = unif(k[1], (n_x, hidden_size), n_x)          # net[0]: Linear(n_x, hidden)
    b1 = unif(k[2], (1, hidden_size), n_x)
    w2 = unif(k[3], (hidden_size, n_y), hidden_size)  # net[2]: Linear(hidden, n_y)
    b2 = unif(k[4], (1, n_y), hidden_size)
    return w_lin, w1, b1, w2, b2


if __name__ == "__main__":
    key = jax.random.PRNGKey(0)
    B, n_x, n_y, hidden = 256, 32, 8, 16

    kx, kp = jax.random.split(key)
    x = jax.random.normal(kx, (B, n_x), jnp.float32)
    w_lin, w1, b1, w2, b2 = init_params(kp, n_x, n_y, hidden)

    # tm=128 so the (padded) batch of 256 exercises a 2-step batch grid.
    y = neural_lin_output(x, w_lin, w1, b1, w2, b2, tm=128)
    y = jax.block_until_ready(y)

    # Pure-JAX reference (same math as the PyTorch forward, nl_on=True).
    y_ref = x @ w_lin + (jnp.tanh(x @ w1 + b1) @ w2 + b2)
    assert y.shape == y_ref.shape, "shape mismatch vs reference"
    assert jnp.allclose(y, y_ref, atol=1e-4, rtol=1e-4), "mismatch vs reference"

    print("KERNEL_OK")
</pallas_src>

<mosaic_0001>
module attributes {stable_mosaic.version = 11 : i64} {
  func.func @_kernel(%arg0: i32, %arg1: memref<128x128xf32, #tpu.memory_space<vmem>>, %arg2: memref<128x128xf32, #tpu.memory_space<vmem>>, %arg3: memref<128x128xf32, #tpu.memory_space<vmem>>, %arg4: memref<128x128xf32, #tpu.memory_space<vmem>>, %arg5: memref<128x128xf32, #tpu.memory_space<vmem>>) attributes {dimension_semantics = [#tpu.dimension_semantics<parallel>], iteration_bounds = array<i64: 2>, scalar_prefetch = 0 : i64, scratch_operands = 0 : i64, tpu.core_type = #tpu.core_type<tc>, window_params = [{transform_indices = @transform_0, window_bounds = array<i64: 128, 128>}, {pipeline_mode = #tpu.pipeline_mode<synchronous>, transform_indices = @transform_1, window_bounds = array<i64: 128, 128>}, {pipeline_mode = #tpu.pipeline_mode<synchronous>, transform_indices = @transform_2, window_bounds = array<i64: 128, 128>}, {pipeline_mode = #tpu.pipeline_mode<synchronous>, transform_indices = @transform_3, window_bounds = array<i64: 128, 128>}, {transform_indices = @transform_4, window_bounds = array<i64: 128, 128>}]} {
    %c0 = arith.constant 0 : index
    %c0_0 = arith.constant 0 : index
    %0 = vector.load %arg1[%c0, %c0_0] : memref<128x128xf32, #tpu.memory_space<vmem>>, vector<128x128xf32>
    %c0_1 = arith.constant 0 : index
    %c0_2 = arith.constant 0 : index
    %1 = vector.load %arg2[%c0_1, %c0_2] : memref<128x128xf32, #tpu.memory_space<vmem>>, vector<128x128xf32>
    %cst = arith.constant dense<0.000000e+00> : vector<128x128xf32>
    %2 = tpu.matmul %0, %1, %cst {dimension_numbers = #tpu.dot_dimension_numbers<[1], [0], [0], [1], [0, 0, 1, 1], [], []>} : vector<128x128xf32>, vector<128x128xf32>, vector<128x128xf32> -> vector<128x128xf32>
    %3 = math.tanh %2 : vector<128x128xf32>
    %c0_3 = arith.constant 0 : index
    %c0_4 = arith.constant 0 : index
    %4 = vector.load %arg3[%c0_3, %c0_4] : memref<128x128xf32, #tpu.memory_space<vmem>>, vector<128x128xf32>
    %cst_5 = arith.constant dense<0.000000e+00> : vector<128x128xf32>
    %5 = tpu.matmul %0, %4, %cst_5 {dimension_numbers = #tpu.dot_dimension_numbers<[1], [0], [0], [1], [0, 0, 1, 1], [], []>} : vector<128x128xf32>, vector<128x128xf32>, vector<128x128xf32> -> vector<128x128xf32>
    %c0_6 = arith.constant 0 : index
    %c0_7 = arith.constant 0 : index
    %6 = vector.load %arg4[%c0_6, %c0_7] : memref<128x128xf32, #tpu.memory_space<vmem>>, vector<128x128xf32>
    %cst_8 = arith.constant dense<0.000000e+00> : vector<128x128xf32>
    %7 = tpu.matmul %3, %6, %cst_8 {dimension_numbers = #tpu.dot_dimension_numbers<[1], [0], [0], [1], [0, 0, 1, 1], [], []>} : vector<128x128xf32>, vector<128x128xf32>, vector<128x128xf32> -> vector<128x128xf32>
    %8 = arith.addf %5, %7 : vector<128x128xf32>
    %c0_9 = arith.constant 0 : index
    %c0_10 = arith.constant 0 : index
    %9 = vector.load %arg5[%c0_9, %c0_10] : memref<128x128xf32, #tpu.memory_space<vmem>>, vector<128x128xf32>
    tpu.vector_store %arg5[%c0_9, %c0_10], %8 {strides = array<i32>} : memref<128x128xf32, #tpu.memory_space<vmem>>, vector<128x128xf32>,
    return
  }
  func.func @transform_0(%arg0: i32) -> (i32, i32) {
    %c0_i32 = arith.constant 0 : i32
    %c0_i32_0 = arith.constant 0 : i32
    return %arg0, %c0_i32 : i32, i32
  }
  func.func @transform_1(%arg0: i32) -> (i32, i32) {
    %c0_i32 = arith.constant 0 : i32
    %c0_i32_0 = arith.constant 0 : i32
    %c0_i32_1 = arith.constant 0 : i32
    return %c0_i32, %c0_i32_0 : i32, i32
  }
  func.func @transform_2(%arg0: i32) -> (i32, i32) {
    %c0_i32 = arith.constant 0 : i32
    %c0_i32_0 = arith.constant 0 : i32
    %c0_i32_1 = arith.constant 0 : i32
    return %c0_i32, %c0_i32_0 : i32, i32
  }
  func.func @transform_3(%arg0: i32) -> (i32, i32) {
    %c0_i32 = arith.constant 0 : i32
    %c0_i32_0 = arith.constant 0 : i32
    %c0_i32_1 = arith.constant 0 : i32
    return %c0_i32, %c0_i32_0 : i32, i32
  }
  func.func @transform_4(%arg0: i32) -> (i32, i32) {
    %c0_i32 = arith.constant 0 : i32
    %c0_i32_0 = arith.constant 0 : i32
    return %arg0, %c0_i32 : i32, i32
  }
}

</mosaic_0001>

<llo_original>
// kernel: tpu_custom_call.1
$region0: #{tpu_custom_call.1}
  #allocation0 [shape = 'u32[]', space=smem, size = 0x4, offset = 0x4, fixed_abs, tag = 'smem constant byte address 0x4 - core index']
  #allocation1 [shape = 'u32[72,128]{1,0:T(1,128)}', space=vmem, size = 0x9000, scoped, tag = 'internal scratch']
  %s0 = inlined_call_operand.hbm [shape: f32[256,128], index: 0, kind: input, shape index: {}]
  %s1 = inlined_call_operand.hbm [shape: f32[128,128], index: 1, kind: input, shape index: {}]
  %s2 = inlined_call_operand.hbm [shape: f32[128,128], index: 2, kind: input, shape index: {}]
  %s3 = inlined_call_operand.hbm [shape: f32[128,128], index: 3, kind: input, shape index: {}]
  %s4 = inlined_call_operand.hbm [shape: f32[256,128], index: 4, kind: output, shape index: {}]
  %s5 = sld [smem:[#allocation0]]
  $region65: #{tpu_custom_call.1} parent=0
    _
  %s7 = ssub.s32 1, %s5
  %s8 = scalar_select 0, %s7, %s5
  $region1: #{tpu_custom_call.1} parent=0
    #allocation2 [shape = 'u8[131072]{0}', space=vmem, size = 0x20000, scoped, tag = 'input window, operand 0']
    #allocation3 [shape = 's32[2]{0}', space=sflag, size = 0x8, scoped, tag = 'scoped memory for tpu_custom_call.1']
    #allocation4 [shape = 's32[2]{0}', space=sflag, size = 0x8, scoped, tag = 'scoped memory for tpu_custom_call.1']
    #allocation5 [shape = 'u8[65536]{0}', space=vmem, size = 0x10000, scoped, tag = 'input window, operand 1, single buffered']
    #allocation6 [shape = 's32[1]{0}', space=sflag, size = 0x4, scoped, tag = 'scoped memory for tpu_custom_call.1']
    #allocation7 [shape = 'u8[65536]{0}', space=vmem, size = 0x10000, scoped, tag = 'input window, operand 2, single buffered']
    #allocation8 [shape = 'u8[65536]{0}', space=vmem, size = 0x10000, scoped, tag = 'input window, operand 3, single buffered']
    #allocation9 [shape = 's32[1]{0}', space=sflag, size = 0x4, scoped, tag = 'scoped memory for tpu_custom_call.1']
    #allocation10 [shape = 'u8[131072]{0}', space=vmem, size = 0x20000, scoped, tag = 'output window, operand 0']
    %9 = vsyncpa [#allocation3], 0
    %s10 = scalar_lea.sflag [#allocation3], 1
    %11 = vsyncpa %s10, 0
    %12 = vsyncpa [#allocation6], 0
    %13 = vsyncpa [#allocation9], 0
    %14 = vsyncpa [#allocation4], 0
    %s15 = scalar_lea.sflag [#allocation4], 1
    %16 = vsyncpa %s15, 0
    loop: start=0, step=1, limit=4
    $region2: #{tpu_custom_call.1} parent=1 // loop_pre_header
      _
    $region3: #{tpu_custom_call.1} parent=1 // loop_header
      %s18 = sphi 0, %s22
      %p19 = scmp.ge.s32.totalorder %s18, 4
      %s28 = sphi 0, %s30
      %s31 = sphi 0, %s28
      %s32 = sphi 0, %s31
      %s48 = sphi 0, %s32
      %s52 = sphi 0, %s52
      %s54 = sphi 0, %s52
      %s55 = sphi 0, %s54
      %s69 = sphi 0, %s55
      %s73 = sphi 0, %s73
      %s75 = sphi 0, %s73
      %s76 = sphi 0, %s75
      %s90 = sphi 0, %s76
      %s94 = sphi 0, %s94
      %s96 = sphi 0, %s94
      %s97 = sphi 0, %s96
      %s111 = sphi 0, %s97
      %s117 = sphi 0, %s119
      %s120 = sphi 0, %s117
      %s121 = sphi 0, %s120
      %s137 = sphi 0, %s121
    $region4: #{tpu_custom_call.1} parent=1 // loop_header_branch
      %21 = sbr.rel (%p19) target = $region8
    $region5: #{tpu_custom_call.1} parent=1 // loop_body
      %s23 = ssub.s32 %s18, 1
      %s24 = ssub.s32 %s18, 2
      %s25 = sadd.s32 %s18, 1
      %s26 = ssub.s32 %s18, %s25
      %p27 = scmp.eq.s32.totalorder %s26, 0
      %s29 = sadd.s32 %s28, 1
      %s30 = scalar_select %p27, %s28, %s29
      %p33 = pneg %p27
      %p34 = scmp.eq.s32.totalorder %s18, 1
      %p35 = por %p33, %p34
      %p36 = scmp.ne.s32.totalorder %s28, %s31
      %p37 = scmp.eq.s32.totalorder %s18, 0
      %p38 = por %p36, %p37
      %p39 = scmp.ne.s32.totalorder %s28, %s31
      %p40 = scmp.eq.s32.totalorder %s23, 1
      %p41 = por %p39, %p40
      %p42 = scmp.ne.s32.totalorder %s31, %s32
      %p43 = scmp.eq.s32.totalorder %s23, 0
      %p44 = por %p42, %p43
      %p45 = scmp.ne.s32.totalorder %s31, %s32
      %p46 = scmp.eq.s32.totalorder %s24, 1
      %p47 = por %p45, %p46
      %p49 = scmp.ne.s32.totalorder %s32, %s48
      %p50 = scmp.eq.s32.totalorder %s24, 0
      %p51 = por %p49, %p50
      %s53 = sadd.s32 %s52, 1
      %p56 = scmp.eq.s32.totalorder %s18, 1
      %p57 = scmp.ne.s32.totalorder %s52, %s54
      %p58 = scmp.eq.s32.totalorder %s18, 0
      %p59 = por %p57, %p58
      %p60 = scmp.ne.s32.totalorder %s52, %s54
      %p61 = scmp.eq.s32.totalorder %s23, 1
      %p62 = por %p60, %p61
      %p63 = scmp.ne.s32.totalorder %s54, %s55
      %p64 = scmp.eq.s32.totalorder %s23, 0
      %p65 = por %p63, %p64
      %p66 = scmp.ne.s32.totalorder %s54, %s55
      %p67 = scmp.eq.s32.totalorder %s24, 1
      %p68 = por %p66, %p67
      %p70 = scmp.ne.s32.totalorder %s55, %s69
      %p71 = scmp.eq.s32.totalorder %s24, 0
      %p72 = por %p70, %p71
      %s74 = sadd.s32 %s73, 1
      %p77 = scmp.eq.s32.totalorder %s18, 1
      %p78 = scmp.ne.s32.totalorder %s73, %s75
      %p79 = scmp.eq.s32.totalorder %s18, 0
      %p80 = por %p78, %p79
      %p81 = scmp.ne.s32.totalorder %s73, %s75
      %p82 = scmp.eq.s32.totalorder %s23, 1
      %p83 = por %p81, %p82
      %p84 = scmp.ne.s32.totalorder %s75, %s76
      %p85 = scmp.eq.s32.totalorder %s23, 0
      %p86 = por %p84, %p85
      %p87 = scmp.ne.s32.totalorder %s75, %s76
      %p88 = scmp.eq.s32.totalorder %s24, 1
      %p89 = por %p87, %p88
      %p91 = scmp.ne.s32.totalorder %s76, %s90
      %p92 = scmp.eq.s32.totalorder %s24, 0
      %p93 = por %p91, %p92
      %s95 = sadd.s32 %s94, 1
      %p98 = scmp.eq.s32.totalorder %s18, 1
      %p99 = scmp.ne.s32.totalorder %s94, %s96
      %p100 = scmp.eq.s32.totalorder %s18, 0
      %p101 = por %p99, %p100
      %p102 = scmp.ne.s32.totalorder %s94, %s96
      %p103 = scmp.eq.s32.totalorder %s23, 1
      %p104 = por %p102, %p103
      %p105 = scmp.ne.s32.totalorder %s96, %s97
      %p106 = scmp.eq.s32.totalorder %s23, 0
      %p107 = por %p105, %p106
      %p108 = scmp.ne.s32.totalorder %s96, %s97
      %p109 = scmp.eq.s32.totalorder %s24, 1
      %p110 = por %p108, %p109
      %p112 = scmp.ne.s32.totalorder %s97, %s111
      %p113 = scmp.eq.s32.totalorder %s24, 0
      %p114 = por %p112, %p113
      %s115 = ssub.s32 %s18, %s25
      %p116 = scmp.eq.s32.totalorder %s115, 0
      %s118 = sadd.s32 %s117, 1
      %s119 = scalar_select %p116, %s117, %s118
      %p122 = pneg %p116
      %p123 = scmp.eq.s32.totalorder %s18, 1
      %p124 = por %p122, %p123
      %p125 = scmp.ne.s32.totalorder %s117, %s120
      %p126 = scmp.eq.s32.totalorder %s18, 0
      %p127 = por %p125, %p126
      %p128 = scmp.ne.s32.totalorder %s117, %s120
      %p129 = scmp.eq.s32.totalorder %s23, 1
      %p130 = por %p128, %p129
      %p131 = scmp.ne.s32.totalorder %s120, %s121
      %p132 = scmp.eq.s32.totalorder %s23, 0
      %p133 = por %p131, %p132
      %p134 = scmp.ne.s32.totalorder %s120, %s121
      %p135 = scmp.eq.s32.totalorder %s24, 1
      %p136 = por %p134, %p135
      %p138 = scmp.ne.s32.totalorder %s121, %s137
      %p139 = scmp.eq.s32.totalorder %s24, 0
      %p140 = por %p138, %p139
      %p141 = scmp.le.s32.totalorder 1, %s18
      %p142 = scmp.lt.s32.totalorder %s18, 3
      %p143 = pnand %p141, %p142
      %p144 = pneg %p143
      // Predicated region
      $region9: #{tpu_custom_call.1} parent=5 // pred_check
        _
      $region10: #{tpu_custom_call.1} parent=5 // pred_check_branch
        %146 = sbr.rel (%p143) target = $region12
      $region11: #{tpu_custom_call.1} parent=5 // pred_region
        %s147 = ssub.s32 %s18, 1
        // Predicated region
        $region13: #{tpu_custom_call.1} parent=11 // pred_check
          %p148 = pneg %p65
        $region14: #{tpu_custom_call.1} parent=11 // pred_check_branch
          %150 = sbr.rel (%p148) target = $region16
        $region15: #{tpu_custom_call.1} parent=11 // pred_region
          %152 = vsyncadd [#allocation6], 0
          %s153 = sshll.u32 %s1, 4
          %s154 = int_to_ptr.hbm [resolvable:$true] %s153
          %s155 = sshll.u32 [#allocation5], 4
          %s156 = int_to_ptr.vmem [resolvable:$true] %s155
          %161 = dma.hbm_to_vmem [thread:$0]  %s154, 2048, %s156, [#allocation6], 128, 128, 8
        $region16: #{tpu_custom_call.1} parent=11 // pred_fallthru
          _
        // Predicated region
        $region17: #{tpu_custom_call.1} parent=11 // pred_check
          %p162 = pneg %p86
        $region18: #{tpu_custom_call.1} parent=11 // pred_check_branch
          %164 = sbr.rel (%p162) target = $region20
        $region19: #{tpu_custom_call.1} parent=11 // pred_region
          %166 = vsyncadd [#allocation6], 0
          %s167 = sshll.u32 %s2, 4
          %s168 = int_to_ptr.hbm [resolvable:$true] %s167
          %s169 = sshll.u32 [#allocation7], 4
          %s170 = int_to_ptr.vmem [resolvable:$true] %s169
          %175 = dma.hbm_to_vmem [thread:$0]  %s168, 2048, %s170, [#allocation6], 128, 128, 8
        $region20: #{tpu_custom_call.1} parent=11 // pred_fallthru
          _
        // Predicated region
        $region21: #{tpu_custom_call.1} parent=11 // pred_check
          %p176 = pneg %p107
        $region22: #{tpu_custom_call.1} parent=11 // pred_check_branch
          %178 = sbr.rel (%p176) target = $region24
        $region23: #{tpu_custom_call.1} parent=11 // pred_region
          %180 = vsyncadd [#allocation9], 0
          %s181 = sshll.u32 %s3, 4
          %s182 = int_to_ptr.hbm [resolvable:$true] %s181
          %s183 = sshll.u32 [#allocation8], 4
          %s184 = int_to_ptr.vmem [resolvable:$true] %s183
          %189 = dma.hbm_to_vmem [thread:$0]  %s182, 2048, %s184, [#allocation9], 128, 128, 8
        $region24: #{tpu_custom_call.1} parent=11 // pred_fallthru
          _
      $region12: #{tpu_custom_call.1} parent=5 // pred_fallthru
        _
      %p190 = scmp.lt.s32.totalorder %s18, 2
      // Predicated region
      $region25: #{tpu_custom_call.1} parent=5 // pred_check
        %p191 = pneg %p190
      $region26: #{tpu_custom_call.1} parent=5 // pred_check_branch
        %193 = sbr.rel (%p191) target = $region28
      $region27: #{tpu_custom_call.1} parent=5 // pred_region
        // Predicated region
        $region29: #{tpu_custom_call.1} parent=27 // pred_check
          %p194 = pneg %p38
        $region30: #{tpu_custom_call.1} parent=27 // pred_check_branch
          %196 = sbr.rel (%p194) target = $region32
        $region31: #{tpu_custom_call.1} parent=27 // pred_region
          %s197 = sand.u32 %s28, 1
          %s198 = scalar_lea.sflag [#allocation3], %s197
          %s199 = sand.u32 %s28, 1
          %s200 = smul.addr %s199, 128
          %s201 = scalar_lea.vmem [#allocation2], %s200
          %s202 = smul.u32 16, %s18
          %204 = vsyncadd %s198, 0
          %s205 = smul.addr %s202, 8
          %s206 = scalar_lea.hbm %s0, %s205
          %s207 = sshll.u32 %s206, 4
          %s208 = int_to_ptr.hbm [resolvable:$true] %s207
          %s209 = sshll.u32 %s201, 4
          %s210 = int_to_ptr.vmem [resolvable:$true] %s209
          %215 = dma.hbm_to_vmem [thread:$0]  %s208, 2048, %s210, %s198, 128, 128, 8
        $region32: #{tpu_custom_call.1} parent=27 // pred_fallthru
          _
      $region28: #{tpu_custom_call.1} parent=5 // pred_fallthru
        _
      %p216 = scmp.le.s32.totalorder 1, %s18
      %p217 = scmp.lt.s32.totalorder %s18, 3
      %p218 = pnand %p216, %p217
      %p219 = pneg %p218
      // Predicated region
      $region33: #{tpu_custom_call.1} parent=5 // pred_check
        _
      $region34: #{tpu_custom_call.1} parent=5 // pred_check_branch
        %221 = sbr.rel (%p218) target = $region36
      $region35: #{tpu_custom_call.1} parent=5 // pred_region
        %s222 = ssub.s32 %s18, 1
        %s223 = sand.u32 %s31, 1
        %s224 = scalar_lea.sflag [#allocation3], %s223
        %s225 = sand.u32 %s31, 1
        %s226 = smul.addr %s225, 128
        %s227 = scalar_lea.vmem [#allocation2], %s226
        // Predicated region
        $region37: #{tpu_custom_call.1} parent=35 // pred_check
          %p228 = pneg %p44
        $region38: #{tpu_custom_call.1} parent=35 // pred_check_branch
          %230 = sbr.rel (%p228) target = $region40
        $region39: #{tpu_custom_call.1} parent=35 // pred_region
          %232 = dma.done %s224, 2048
        $region40: #{tpu_custom_call.1} parent=35 // pred_fallthru
          _
        // Predicated region
        $region41: #{tpu_custom_call.1} parent=35 // pred_check
          %p233 = pneg %p65
        $region42: #{tpu_custom_call.1} parent=35 // pred_check_branch
          %235 = sbr.rel (%p233) target = $region44
        $region43: #{tpu_custom_call.1} parent=35 // pred_region
          %237 = dma.done [#allocation6], 2048
        $region44: #{tpu_custom_call.1} parent=35 // pred_fallthru
          _
        // Predicated region
        $region45: #{tpu_custom_call.1} parent=35 // pred_check
          %p238 = pneg %p86
        $region46: #{tpu_custom_call.1} parent=35 // pred_check_branch
          %240 = sbr.rel (%p238) target = $region48
        $region47: #{tpu_custom_call.1} parent=35 // pred_region
          %242 = dma.done [#allocation6], 2048
        $region48: #{tpu_custom_call.1} parent=35 // pred_fallthru
          _
        // Predicated region
        $region49: #{tpu_custom_call.1} parent=35 // pred_check
          %p243 = pneg %p107
        $region50: #{tpu_custom_call.1} parent=35 // pred_check_branch
          %245 = sbr.rel (%p243) target = $region52
        $region51: #{tpu_custom_call.1} parent=35 // pred_region
          %247 = dma.done [#allocation9], 2048
        $region52: #{tpu_custom_call.1} parent=35 // pred_fallthru
          _
        %s248 = sand.u32 %s31, 1
        %s249 = scalar_lea.sflag [#allocation3], %s248
        %s250 = sand.u32 %s31, 1
        %s251 = smul.addr %s250, 128
        %s252 = scalar_lea.vmem [#allocation2], %s251
        %p253 = pneg %p44
        %p254 = pneg %p41
        %p255 = pneg %p65
        %p256 = pneg %p62
        %p257 = pneg %p86
        %p258 = pneg %p83
        %p259 = pneg %p107
        %p260 = pneg %p104
        %p261 = pneg %p133
        %p262 = pneg %p130
        %s263 = sand.u32 %s120, 1
        %s264 = scalar_lea.sflag [#allocation4], %s263
        %s265 = sand.u32 %s120, 1
        %s266 = smul.addr %s265, 128
        %s267 = scalar_lea.vmem [#allocation10], %s266
        %s268 = smul.u32 16, %s23
        %s269 = smul.u32 16, %s23
        %v270 = vld [vmem:[%s227] sm:$0xff]
        %v271 = vld [vmem:[%s227 + $0x8] sm:$0xff]
        %v272 = vld [vmem:[%s227 + $0x10] sm:$0xff]
        %v273 = vld [vmem:[%s227 + $0x18] sm:$0xff]
        %v274 = vld [vmem:[%s227 + $0x20] sm:$0xff]
        %v275 = vld [vmem:[%s227 + $0x28] sm:$0xff]
        %v276 = vld [vmem:[%s227 + $0x30] sm:$0xff]
        %v277 = vld [vmem:[%s227 + $0x38] sm:$0xff]
        %v278 = vld [vmem:[%s227 + $0x40] sm:$0xff]
        %v279 = vld [vmem:[%s227 + $0x48] sm:$0xff]
        %v280 = vld [vmem:[%s227 + $0x50] sm:$0xff]
        %v281 = vld [vmem:[%s227 + $0x58] sm:$0xff]
        %v282 = vld [vmem:[%s227 + $0x60] sm:$0xff]
        %v283 = vld [vmem:[%s227 + $0x68] sm:$0xff]
        %v284 = vld [vmem:[%s227 + $0x70] sm:$0xff]
        %v285 = vld [vmem:[%s227 + $0x78] sm:$0xff]
        %v286 = vld [vmem:[#allocation5] sm:$0xff]
        %v287 = vld [vmem:[#allocation5 + $0x8] sm:$0xff]
        %v288 = vld [vmem:[#allocation5 + $0x10] sm:$0xff]
        %v289 = vld [vmem:[#allocation5 + $0x18] sm:$0xff]
        %v290 = vld [vmem:[#allocation5 + $0x20] sm:$0xff]
        %v291 = vld [vmem:[#allocation5 + $0x28] sm:$0xff]
        %v292 = vld [vmem:[#allocation5 + $0x30] sm:$0xff]
        %v293 = vld [vmem:[#allocation5 + $0x38] sm:$0xff]
        %v294 = vld [vmem:[#allocation5 + $0x40] sm:$0xff]
        %v295 = vld [vmem:[#allocation5 + $0x48] sm:$0xff]
        %v296 = vld [vmem:[#allocation5 + $0x50] sm:$0xff]
        %v297 = vld [vmem:[#allocation5 + $0x58] sm:$0xff]
        %v298 = vld [vmem:[#allocation5 + $0x60] sm:$0xff]
        %v299 = vld [vmem:[#allocation5 + $0x68] sm:$0xff]
        %v300 = vld [vmem:[#allocation5 + $0x70] sm:$0xff]
        %v301 = vld [vmem:[#allocation5 + $0x78] sm:$0xff]
        %302 = vmatpush.msra.mxu0 %v301
        %303 = vmatpush.msra.mxu0 %v300
        %304 = vmatpush.msra.mxu0 %v299
        %305 = vmatpush.msra.mxu0 %v298
        %306 = vmatpush.msra.mxu0 %v297
        %307 = vmatpush.msra.mxu0 %v296
        %308 = vmatpush.msra.mxu0 %v295
        %309 = vmatpush.msra.mxu0 %v294
        %310 = vmatpush.msra.mxu0 %v293
        %311 = vmatpush.msra.mxu0 %v292
        %312 = vmatpush.msra.mxu0 %v291
        %313 = vmatpush.msra.mxu0 %v290
        %314 = vmatpush.msra.mxu0 %v289
        %315 = vmatpush.msra.mxu0 %v288
        %316 = vmatpush.msra.mxu0 %v287
        %317 = vmatpush.msra.mxu0 %v286
        %318 = vmatmul.f32.gmra.mxu0 %v270
        %v319 = vpop.f32.mrf.mxu0
        %v320 = vadd.f32 0.0, %v319
        %321 = vmatmul.f32.gmra.mxu0 %v271
        %v322 = vpop.f32.mrf.mxu0
        %v323 = vadd.f32 0.0, %v322
        %324 = vmatmul.f32.gmra.mxu0 %v272
        %v325 = vpop.f32.mrf.mxu0
        %v326 = vadd.f32 0.0, %v325
        %327 = vmatmul.f32.gmra.mxu0 %v273
        %v328 = vpop.f32.mrf.mxu0
        %v329 = vadd.f32 0.0, %v328
        %330 = vmatmul.f32.gmra.mxu0 %v274
        %v331 = vpop.f32.mrf.mxu0
        %v332 = vadd.f32 0.0, %v331
        %333 = vmatmul.f32.gmra.mxu0 %v275
        %v334 = vpop.f32.mrf.mxu0
        %v335 = vadd.f32 0.0, %v334
        %336 = vmatmul.f32.gmra.mxu0 %v276
        %v337 = vpop.f32.mrf.mxu0
        %v338 = vadd.f32 0.0, %v337
        %339 = vmatmul.f32.gmra.mxu0 %v277
        %v340 = vpop.f32.mrf.mxu0
        %v341 = vadd.f32 0.0, %v340
        %342 = vmatmul.f32.gmra.mxu0 %v278
        %v343 = vpop.f32.mrf.mxu0
        %v344 = vadd.f32 0.0, %v343
        %345 = vmatmul.f32.gmra.mxu0 %v279
        %v346 = vpop.f32.mrf.mxu0
        %v347 = vadd.f32 0.0, %v346
        %348 = vmatmul.f32.gmra.mxu0 %v280
        %v349 = vpop.f32.mrf.mxu0
        %v350 = vadd.f32 0.0, %v349
        %351 = vmatmul.f32.gmra.mxu0 %v281
        %v352 = vpop.f32.mrf.mxu0
        %v353 = vadd.f32 0.0, %v352
        %354 = vmatmul.f32.gmra.mxu0 %v282
        %v355 = vpop.f32.mrf.mxu0
        %v356 = vadd.f32 0.0, %v355
        %357 = vmatmul.f32.gmra.mxu0 %v283
        %v358 = vpop.f32.mrf.mxu0
        %v359 = vadd.f32 0.0, %v358
        %360 = vmatmul.f32.gmra.mxu0 %v284
        %v361 = vpop.f32.mrf.mxu0
        %v362 = vadd.f32 0.0, %v361
        %363 = vmatmul.f32.gmra.mxu0 %v285
        %v364 = vpop.f32.mrf.mxu0
        %v365 = vadd.f32 0.0, %v364
        %366 = vdwg.mxu0
        %v367 = vtanh.pop %v320
        %v368 = vtanh.pop %v323
        %v369 = vtanh.pop %v326
        %v370 = vtanh.pop %v329
        %v371 = vtanh.pop %v332
        %v372 = vtanh.pop %v335
        %v373 = vtanh.pop %v338
        %v374 = vtanh.pop %v341
        %v375 = vtanh.pop %v344
        %v376 = vtanh.pop %v347
        %v377 = vtanh.pop %v350
        %v378 = vtanh.pop %v353
        %v379 = vtanh.pop %v356
        %v380 = vtanh.pop %v359
        %v381 = vtanh.pop %v362
        %v382 = vtanh.pop %v365
        %v383 = vld [vmem:[#allocation7] sm:$0xff]
        %v384 = vld [vmem:[#allocation7 + $0x8] sm:$0xff]
        %v385 = vld [vmem:[#allocation7 + $0x10] sm:$0xff]
        %v386 = vld [vmem:[#allocation7 + $0x18] sm:$0xff]
        %v387 = vld [vmem:[#allocation7 + $0x20] sm:$0xff]
        %v388 = vld [vmem:[#allocation7 + $0x28] sm:$0xff]
        %v389 = vld [vmem:[#allocation7 + $0x30] sm:$0xff]
        %v390 = vld [vmem:[#allocation7 + $0x38] sm:$0xff]
        %v391 = vld [vmem:[#allocation7 + $0x40] sm:$0xff]
        %v392 = vld [vmem:[#allocation7 + $0x48] sm:$0xff]
        %v393 = vld [vmem:[#allocation7 + $0x50] sm:$0xff]
        %v394 = vld [vmem:[#allocation7 + $0x58] sm:$0xff]
        %v395 = vld [vmem:[#allocation7 + $0x60] sm:$0xff]
        %v396 = vld [vmem:[#allocation7 + $0x68] sm:$0xff]
        %v397 = vld [vmem:[#allocation7 + $0x70] sm:$0xff]
        %v398 = vld [vmem:[#allocation7 + $0x78] sm:$0xff]
        %v399 = vld [vmem:[#allocation8] sm:$0xff]
        %v400 = vld [vmem:[#allocation8 + $0x8] sm:$0xff]
        %v401 = vld [vmem:[#allocation8 + $0x10] sm:$0xff]
        %v402 = vld [vmem:[#allocation8 + $0x18] sm:$0xff]
        %v403 = vld [vmem:[#allocation8 + $0x20] sm:$0xff]
        %v404 = vld [vmem:[#allocation8 + $0x28] sm:$0xff]
        %v405 = vld [vmem:[#allocation8 + $0x30] sm:$0xff]
        %v406 = vld [vmem:[#allocation8 + $0x38] sm:$0xff]
        %v407 = vld [vmem:[#allocation8 + $0x40] sm:$0xff]
        %v408 = vld [vmem:[#allocation8 + $0x48] sm:$0xff]
        %v409 = vld [vmem:[#allocation8 + $0x50] sm:$0xff]
        %v410 = vld [vmem:[#allocation8 + $0x58] sm:$0xff]
        %v411 = vld [vmem:[#allocation8 + $0x60] sm:$0xff]
        %v412 = vld [vmem:[#allocation8 + $0x68] sm:$0xff]
        %v413 = vld [vmem:[#allocation8 + $0x70] sm:$0xff]
        %v414 = vld [vmem:[#allocation8 + $0x78] sm:$0xff]
        %415 = vmatpush.msra.mxu0 %v414
        %416 = vmatpush.msra.mxu0 %v413
        %417 = vmatpush.msra.mxu0 %v412
        %418 = vmatpush.msra.mxu0 %v411
        %419 = vmatpush.msra.mxu0 %v410
        %420 = vmatpush.msra.mxu0 %v409
        %421 = vmatpush.msra.mxu0 %v408
        %422 = vmatpush.msra.mxu0 %v407
        %423 = vmatpush.msra.mxu0 %v406
        %424 = vmatpush.msra.mxu0 %v405
        %425 = vmatpush.msra.mxu0 %v404
        %426 = vmatpush.msra.mxu0 %v403
        %427 = vmatpush.msra.mxu0 %v402
        %428 = vmatpush.msra.mxu0 %v401
        %429 = vmatpush.msra.mxu0 %v400
        %430 = vmatpush.msra.mxu0 %v399
        %431 = vmatmul.f32.gmra.mxu0 %v367
        %v432 = vpop.f32.mrf.mxu0
        %v433 = vadd.f32 0.0, %v432
        %434 = vmatmul.f32.gmra.mxu0 %v368
        %v435 = vpop.f32.mrf.mxu0
        %v436 = vadd.f32 0.0, %v435
        %437 = vmatmul.f32.gmra.mxu0 %v369
        %v438 = vpop.f32.mrf.mxu0
        %v439 = vadd.f32 0.0, %v438
        %440 = vmatmul.f32.gmra.mxu0 %v370
        %v441 = vpop.f32.mrf.mxu0
        %v442 = vadd.f32 0.0, %v441
        %443 = vmatmul.f32.gmra.mxu0 %v371
        %v444 = vpop.f32.mrf.mxu0
        %v445 = vadd.f32 0.0, %v444
        %446 = vmatmul.f32.gmra.mxu0 %v372
        %v447 = vpop.f32.mrf.mxu0
        %v448 = vadd.f32 0.0, %v447
        %449 = vmatmul.f32.gmra.mxu0 %v373
        %v450 = vpop.f32.mrf.mxu0
        %v451 = vadd.f32 0.0, %v450
        %452 = vmatmul.f32.gmra.mxu0 %v374
        %v453 = vpop.f32.mrf.mxu0
        %v454 = vadd.f32 0.0, %v453
        %455 = vmatmul.f32.gmra.mxu0 %v375
        %v456 = vpop.f32.mrf.mxu0
        %v457 = vadd.f32 0.0, %v456
        %458 = vmatmul.f32.gmra.mxu0 %v376
        %v459 = vpop.f32.mrf.mxu0
        %v460 = vadd.f32 0.0, %v459
        %461 = vmatmul.f32.gmra.mxu0 %v377
        %v462 = vpop.f32.mrf.mxu0
        %v463 = vadd.f32 0.0, %v462
        %464 = vmatmul.f32.gmra.mxu0 %v378
        %v465 = vpop.f32.mrf.mxu0
        %v466 = vadd.f32 0.0, %v465
        %467 = vmatmul.f32.gmra.mxu0 %v379
        %v468 = vpop.f32.mrf.mxu0
        %v469 = vadd.f32 0.0, %v468
        %470 = vmatmul.f32.gmra.mxu0 %v380
        %v471 = vpop.f32.mrf.mxu0
        %v472 = vadd.f32 0.0, %v471
        %473 = vmatmul.f32.gmra.mxu0 %v381
        %v474 = vpop.f32.mrf.mxu0
        %v475 = vadd.f32 0.0, %v474
        %476 = vmatmul.f32.gmra.mxu0 %v382
        %v477 = vpop.f32.mrf.mxu0
        %v478 = vadd.f32 0.0, %v477
        %479 = vdwg.mxu0
        %480 = vmatpush.msra.mxu0 %v398
        %481 = vmatpush.msra.mxu0 %v397
        %482 = vmatpush.msra.mxu0 %v396
        %483 = vmatpush.msra.mxu0 %v395
        %484 = vmatpush.msra.mxu0 %v394
        %485 = vmatpush.msra.mxu0 %v393
        %486 = vmatpush.msra.mxu0 %v392
        %487 = vmatpush.msra.mxu0 %v391
        %488 = vmatpush.msra.mxu0 %v390
        %489 = vmatpush.msra.mxu0 %v389
        %490 = vmatpush.msra.mxu0 %v388
        %491 = vmatpush.msra.mxu0 %v387
        %492 = vmatpush.msra.mxu0 %v386
        %493 = vmatpush.msra.mxu0 %v385
        %494 = vmatpush.msra.mxu0 %v384
        %495 = vmatpush.msra.mxu0 %v383
        %496 = vmatmul.f32.gmra.mxu0 %v270
        %v497 = vpop.f32.mrf.mxu0
        %v498 = vadd.f32 %v433, %v497
        %499 = vmatmul.f32.gmra.mxu0 %v271
        %v500 = vpop.f32.mrf.mxu0
        %v501 = vadd.f32 %v436, %v500
        %502 = vmatmul.f32.gmra.mxu0 %v272
        %v503 = vpop.f32.mrf.mxu0
        %v504 = vadd.f32 %v439, %v503
        %505 = vmatmul.f32.gmra.mxu0 %v273
        %v506 = vpop.f32.mrf.mxu0
        %v507 = vadd.f32 %v442, %v506
        %508 = vmatmul.f32.gmra.mxu0 %v274
        %v509 = vpop.f32.mrf.mxu0
        %v510 = vadd.f32 %v445, %v509
        %511 = vmatmul.f32.gmra.mxu0 %v275
        %v512 = vpop.f32.mrf.mxu0
        %v513 = vadd.f32 %v448, %v512
        %514 = vmatmul.f32.gmra.mxu0 %v276
        %v515 = vpop.f32.mrf.mxu0
        %v516 = vadd.f32 %v451, %v515
        %517 = vmatmul.f32.gmra.mxu0 %v277
        %v518 = vpop.f32.mrf.mxu0
        %v519 = vadd.f32 %v454, %v518
        %520 = vmatmul.f32.gmra.mxu0 %v278
        %v521 = vpop.f32.mrf.mxu0
        %v522 = vadd.f32 %v457, %v521
        %523 = vmatmul.f32.gmra.mxu0 %v279
        %v524 = vpop.f32.mrf.mxu0
        %v525 = vadd.f32 %v460, %v524
        %526 = vmatmul.f32.gmra.mxu0 %v280
        %v527 = vpop.f32.mrf.mxu0
        %v528 = vadd.f32 %v463, %v527
        %529 = vmatmul.f32.gmra.mxu0 %v281
        %v530 = vpop.f32.mrf.mxu0
        %v531 = vadd.f32 %v466, %v530
        %532 = vmatmul.f32.gmra.mxu0 %v282
        %v533 = vpop.f32.mrf.mxu0
        %v534 = vadd.f32 %v469, %v533
        %535 = vmatmul.f32.gmra.mxu0 %v283
        %v536 = vpop.f32.mrf.mxu0
        %v537 = vadd.f32 %v472, %v536
        %538 = vmatmul.f32.gmra.mxu0 %v284
        %v539 = vpop.f32.mrf.mxu0
        %v540 = vadd.f32 %v475, %v539
        %541 = vmatmul.f32.gmra.mxu0 %v285
        %v542 = vpop.f32.mrf.mxu0
        %v543 = vadd.f32 %v478, %v542
        %544 = vdwg.mxu0
        %545 = vst [vmem:[%s267] sm:$0xff] %v498
        %546 = vst [vmem:[%s267 + $0x8] sm:$0xff] %v501
        %547 = vst [vmem:[%s267 + $0x10] sm:$0xff] %v504
        %548 = vst [vmem:[%s267 + $0x18] sm:$0xff] %v507
        %549 = vst [vmem:[%s267 + $0x20] sm:$0xff] %v510
        %550 = vst [vmem:[%s267 + $0x28] sm:$0xff] %v513
        %551 = vst [vmem:[%s267 + $0x30] sm:$0xff] %v516
        %552 = vst [vmem:[%s267 + $0x38] sm:$0xff] %v519
        %553 = vst [vmem:[%s267 + $0x40] sm:$0xff] %v522
        %554 = vst [vmem:[%s267 + $0x48] sm:$0xff] %v525
        %555 = vst [vmem:[%s267 + $0x50] sm:$0xff] %v528
        %556 = vst [vmem:[%s267 + $0x58] sm:$0xff] %v531
        %557 = vst [vmem:[%s267 + $0x60] sm:$0xff] %v534
        %558 = vst [vmem:[%s267 + $0x68] sm:$0xff] %v537
        %559 = vst [vmem:[%s267 + $0x70] sm:$0xff] %v540
        %560 = vst [vmem:[%s267 + $0x78] sm:$0xff] %v543
        %s561 = sand.u32 %s120, 1
        %s562 = scalar_lea.sflag [#allocation4], %s561
        %s563 = sand.u32 %s120, 1
        %s564 = smul.addr %s563, 128
        %s565 = scalar_lea.vmem [#allocation10], %s564
        // Predicated region
        $region53: #{tpu_custom_call.1} parent=35 // pred_check
          %p566 = pneg %p130
        $region54: #{tpu_custom_call.1} parent=35 // pred_check_branch
          %568 = sbr.rel (%p566) target = $region56
        $region55: #{tpu_custom_call.1} parent=35 // pred_region
          %s569 = smul.u32 16, %s23
          %571 = vsyncadd %s562, 0
          %s572 = smul.addr %s569, 8
          %s573 = scalar_lea.hbm %s4, %s572
          %s574 = sshll.u32 %s565, 4
          %s575 = int_to_ptr.vmem [resolvable:$true] %s574
          %s576 = sshll.u32 %s573, 4
          %s577 = int_to_ptr.hbm [resolvable:$true] %s576
          %582 = dma.vmem_to_hbm [thread:$0]  %s575, 2048, %s577, %s562, 128, 128, 8
        $region56: #{tpu_custom_call.1} parent=35 // pred_fallthru
          _
      $region36: #{tpu_custom_call.1} parent=5 // pred_fallthru
        _
      %p583 = scmp.le.s32.totalorder 2, %s18
      // Predicated region
      $region57: #{tpu_custom_call.1} parent=5 // pred_check
        %p584 = pneg %p583
      $region58: #{tpu_custom_call.1} parent=5 // pred_check_branch
        %586 = sbr.rel (%p584) target = $region60
      $region59: #{tpu_custom_call.1} parent=5 // pred_region
        %s587 = ssub.s32 %s18, 2
        // Predicated region
        $region61: #{tpu_custom_call.1} parent=59 // pred_check
          %p588 = pneg %p136
        $region62: #{tpu_custom_call.1} parent=59 // pred_check_branch
          %590 = sbr.rel (%p588) target = $region64
        $region63: #{tpu_custom_call.1} parent=59 // pred_region
          %s591 = sand.u32 %s121, 1
          %s592 = scalar_lea.sflag [#allocation4], %s591
          %s593 = sand.u32 %s121, 1
          %s594 = smul.addr %s593, 128
          %s595 = scalar_lea.vmem [#allocation10], %s594
          %597 = dma.done %s592, 2048
        $region64: #{tpu_custom_call.1} parent=59 // pred_fallthru
          _
      $region60: #{tpu_custom_call.1} parent=5 // pred_fallthru
        _
    $region6: #{tpu_custom_call.1} parent=1 // loop_footer
      %s22 = sadd.s32 1, %s18
    $region7: #{tpu_custom_call.1} parent=1 // loop_footer_branch
      %17 = sbr.rel target = $region3
    $region8: #{tpu_custom_call.1} parent=1 // loop_exit
      _
    %598 = vsyncpa [#allocation3], 1
    %s599 = scalar_lea.sflag [#allocation3], 1
    %600 = vsyncpa %s599, 1
    %601 = vsyncpa [#allocation6], 1
    %602 = vsyncpa [#allocation9], 1
    %603 = vsyncpa [#allocation4], 1
    %s604 = scalar_lea.sflag [#allocation4], 1
    %605 = vsyncpa %s604, 1

</llo_original>
